<compile_context>
chip_gen: v5e
topology: v5e:2x2
jax: 0.10.0
libtpu: 0.0.40
codegen_flags: <defaults>
</compile_context>

<pallas_src>
import functools

import jax
import jax.numpy as jnp
from jax import lax
from jax.experimental import pallas as pl
from jax.experimental.pallas import tpu as pltpu

_LANES = 128
_SUBLANES = 8


def _round_up(x, m):
    return ((x + m - 1) // m) * m


def _vmem_capacity_bytes():
    try:
        return int(pltpu.get_tpu_info().vmem_capacity_bytes)
    except Exception:
        return 64 * 1024 * 1024  # conservative fallback (v7x per-TensorCore VMEM)


# --------------------------------------------------------------------------------------
# Path A: streaming kernel (small / medium vocab).  One row block of the full vocab per
# grid step; gather via compare+select in the input dtype; per-block partial sums.
# --------------------------------------------------------------------------------------
def _lmc_stream_kernel(inp_ref, tgt_ref, msk_ref, out_ref):
    inp = inp_ref[...]                                   # (Tt, V)  input dtype
    tgt = tgt_ref[...]                                   # (Tt, 1)  int32
    msk = msk_ref[...]                                   # (Tt, 1)  f32

    lane = lax.broadcasted_iota(jnp.int32, inp.shape, 1)       # (Tt, V)
    sel = jnp.where(lane == tgt, inp, 0)                       # exact; single lane/row
    gathered = jnp.sum(sel, axis=-1, keepdims=True).astype(jnp.float32)

    # Masked rows (incl. garbage from the padded last block) contribute exactly 0:
    # select, never multiply a possibly -inf/NaN log-prob by 0.
    nll = jnp.where(msk != 0.0, (-gathered) * msk, 0.0)
    out_ref[...] = jnp.broadcast_to(jnp.sum(nll), out_ref.shape).astype(out_ref.dtype)


# --------------------------------------------------------------------------------------
# Path B: target-slab gather kernel (large vocab).  The (rows, V) array stays in HBM;
# for each row we DMA only the 128-lane slab that contains its target.
# --------------------------------------------------------------------------------------
def _lmc_gather_kernel(vocab, rows_total, tgt_smem, inp_hbm, tgt_ref, msk_ref,
                       out_ref, buf, sem):
    block_rows = buf.shape[0]
    row0 = pl.program_id(0) * block_rows

    # Issue one 128-lane slab fetch per row (data-dependent address from SMEM).
    @pl.loop(0, block_rows)
    def _issue(r):
        row = jnp.minimum(row0 + r, rows_total - 1)            # clamp padded rows
        t = tgt_smem[row0 + r]
        t = jnp.minimum(jnp.maximum(t, 0), vocab - 1)
        col = jnp.minimum((t // _LANES) * _LANES, vocab - _LANES)
        pltpu.make_async_copy(
            inp_hbm.at[pl.ds(row, 1), pl.ds(col, _LANES)],
            buf.at[pl.ds(r, 1), :],
            sem,
        ).start()

    # Drain: every copy is the same size, so waiting block_rows times on the shared
    # semaphore is exact (final wait can only pass once all copies have landed).
    @pl.loop(0, block_rows)
    def _drain(_):
        pltpu.make_async_copy(
            inp_hbm.at[pl.ds(0, 1), pl.ds(0, _LANES)],
            buf.at[pl.ds(0, 1), :],
            sem,
        ).wait()

    tgt = tgt_ref[...]                                         # (Tt, 1) int32
    msk = msk_ref[...]                                         # (Tt, 1) f32
    tgt_c = jnp.clip(tgt, 0, vocab - 1)
    slab = jnp.minimum((tgt_c // _LANES) * _LANES, vocab - _LANES)   # matches DMA col
    col_id = lax.broadcasted_iota(jnp.int32, buf.shape, 1) + slab    # global vocab id
    sel = jnp.where(col_id == tgt, buf[...], 0)                      # exact select
    gathered = jnp.sum(sel, axis=-1, keepdims=True).astype(jnp.float32)

    nll = jnp.where(msk != 0.0, (-gathered) * msk, 0.0)
    out_ref[...] = jnp.broadcast_to(jnp.sum(nll), out_ref.shape).astype(out_ref.dtype)


# --------------------------------------------------------------------------------------
# Wrapper
# --------------------------------------------------------------------------------------
def language_model_criterion(inp, target, mask, *, block_rows=None,
                             target_block_bytes=None, gather_min_vocab=8192,
                             force_gather=None):
    """inp: (B, T, V) log-probs (f32/bf16); target: (B, T') int; mask: (B, T') float.

    Returns the scalar mean NLL over masked positions (matches the PyTorch module).
    Notes: out-of-range target ids contribute 0 (PyTorch's gather would raise);
    an all-zero mask yields NaN (0/0), matching the PyTorch module.
    """
    B, T, V = inp.shape
    target = target[:, :T].astype(jnp.int32)
    mask = mask[:, :T].astype(jnp.float32)

    den = jnp.sum(mask)                       # tiny; keep outside the kernel

    rows = B * T
    inp2 = inp.reshape(rows, V)
    tgt2 = target.reshape(rows, 1)
    msk2 = mask.reshape(rows, 1)

    itemsize = jnp.dtype(inp.dtype).itemsize
    vmem_cap = _vmem_capacity_bytes()
    vmem_limit = int(min(vmem_cap // 2, 64 * 1024 * 1024))     # 64 MiB v5e/v6e, 32 MiB v7x

    if force_gather is None:
        use_gather = V >= max(gather_min_vocab, _LANES)
    else:
        use_gather = bool(force_gather) and V >= _LANES

    # ---- pick the row tile -----------------------------------------------------------
    if not use_gather:
        if target_block_bytes is None:
            target_block_bytes = (8 if vmem_cap >= 96 * 2**20 else 4) * 2**20
        if block_rows is None:
            block_rows = max(_SUBLANES,
                             (target_block_bytes // (V * itemsize)) // _SUBLANES * _SUBLANES)
        # VMEM guard: 2x double-buffered input block + lane-padded (rows,1) tgt/msk blocks.
        per_row_bytes = V * itemsize + 2 * _LANES * 4
        cap_rows = max(_SUBLANES,
                       (int(0.4 * vmem_limit) // per_row_bytes) // _SUBLANES * _SUBLANES)
        block_rows = min(int(block_rows), cap_rows)
    else:
        if block_rows is None:
            block_rows = 256          # >=8 slab fetches per step amortize DMA/step overhead

    block_rows = max(_SUBLANES, (int(block_rows) // _SUBLANES) * _SUBLANES)
    block_rows = min(block_rows, _round_up(rows, _SUBLANES))
    if rows > _SUBLANES:
        # Megacore: guarantee >= 2 row blocks so both v7x TensorCores get work.
        block_rows = min(block_rows, _round_up(-(-rows // 2), _SUBLANES))

    num_blocks = -(-rows // block_rows)
    rows_pad = num_blocks * block_rows
    pad = rows_pad - rows
    if pad:
        # Only the tiny per-row arrays are padded (mask==0 -> padded rows contribute 0).
        # The big (rows, V) array is NOT padded/copied; its partial last block is
        # handled by the mask-gated select in the kernel.
        tgt2 = jnp.pad(tgt2, ((0, pad), (0, 0)))
        msk2 = jnp.pad(msk2, ((0, pad), (0, 0)))

    out_shape = jax.ShapeDtypeStruct((num_blocks, _SUBLANES, _LANES), jnp.float32)

    if not use_gather:
        cost = pl.CostEstimate(
            flops=3 * rows * V, transcendentals=0,
            bytes_accessed=rows * V * itemsize + rows_pad * 8
            + num_blocks * _SUBLANES * _LANES * 4)
        partials = pl.pallas_call(
            _lmc_stream_kernel,
            out_shape=out_shape,
            grid_spec=pltpu.PrefetchScalarGridSpec(
                num_scalar_prefetch=0,
                grid=(num_blocks,),
                in_specs=[
                    pl.BlockSpec((block_rows, V), lambda i: (i, 0)),
                    pl.BlockSpec((block_rows, 1), lambda i: (i, 0)),
                    pl.BlockSpec((block_rows, 1), lambda i: (i, 0)),
                ],
                out_specs=pl.BlockSpec((1, _SUBLANES, _LANES), lambda i: (i, 0, 0)),
            ),
            compiler_params=pltpu.CompilerParams(
                dimension_semantics=("parallel",),
                vmem_limit_bytes=vmem_limit,
            ),
            cost_estimate=cost,
        )(inp2, tgt2, msk2)
    else:
        tgt_flat = tgt2.reshape(rows_pad)      # scalar-prefetch copy for DMA addressing
        kernel = functools.partial(_lmc_gather_kernel, V, rows)
        cost = pl.CostEstimate(
            flops=4 * rows_pad * _LANES, transcendentals=0,
            bytes_accessed=rows_pad * _LANES * itemsize + rows_pad * 12
            + num_blocks * _SUBLANES * _LANES * 4)
        partials = pl.pallas_call(
            kernel,
            out_shape=out_shape,
            grid_spec=pltpu.PrefetchScalarGridSpec(
                num_scalar_prefetch=1,
                grid=(num_blocks,),
                in_specs=[
                    pl.BlockSpec(memory_space=pl.ANY),                       # log-probs stay in HBM
                    pl.BlockSpec((block_rows, 1), lambda i, tgt: (i, 0)),    # targets (lane select)
                    pl.BlockSpec((block_rows, 1), lambda i, tgt: (i, 0)),    # mask
                ],
                out_specs=pl.BlockSpec((1, _SUBLANES, _LANES),
                                       lambda i, tgt: (i, 0, 0)),
                scratch_shapes=[
                    pltpu.VMEM((block_rows, _LANES), inp.dtype),   # gathered slabs
                    pltpu.SemaphoreType.DMA,
                ],
            ),
            compiler_params=pltpu.CompilerParams(
                dimension_semantics=("parallel",),
                vmem_limit_bytes=vmem_limit,
            ),
            cost_estimate=cost,
        )(tgt_flat, inp2, tgt2, msk2)

    num = jnp.sum(partials[:, 0, 0])
    return num / den


def _reference(inp, target, mask):
    T = inp.shape[1]
    target = target[:, :T]
    mask = mask[:, :T].astype(jnp.float32)
    g = jnp.take_along_axis(inp.astype(jnp.float32), target[:, :, None], axis=2)[:, :, 0]
    return jnp.sum(-g * mask) / jnp.sum(mask)


if __name__ == "__main__":
    key = jax.random.PRNGKey(0)
    k1, k2, k3, k4 = jax.random.split(key, 4)

    # ---- Test 1: streaming path, f32, multi-block grid + partial last block ----------
    B, T, V = 2, 9, 256
    T_full = T + 2                                      # target/mask longer than input T
    logits = jax.random.normal(k1, (B, T, V), dtype=jnp.float32)
    inp = jax.nn.log_softmax(logits, axis=-1)
    target = jax.random.randint(k2, (B, T_full), 0, V, dtype=jnp.int32)
    lengths = jnp.array([T, T - 3], dtype=jnp.int32)
    mask = (jnp.arange(T_full)[None, :] < lengths[:, None]).astype(jnp.float32)

    out = language_model_criterion(inp, target, mask, block_rows=8)
    out = jax.block_until_ready(out)
    ref = _reference(inp, target, mask)
    assert jnp.allclose(out, ref, rtol=1e-5, atol=1e-5), ("stream f32", out, ref)

    # ---- Test 2: streaming path, bf16 input (deferred-upcast path) --------------------
    inp_bf16 = inp.astype(jnp.bfloat16)
    out_bf = language_model_criterion(inp_bf16, target, mask, block_rows=8)
    out_bf = jax.block_until_ready(out_bf)
    ref_bf = _reference(inp_bf16, target, mask)
    assert jnp.allclose(out_bf, ref_bf, rtol=1e-5, atol=1e-5), ("stream bf16", out_bf, ref_bf)

    # ---- Test 3: forced target-slab gather path (vocab multiple of 128) ---------------
    B3, T3, V3 = 2, 5, 1024
    logits3 = jax.random.normal(k3, (B3, T3, V3), dtype=jnp.float32)
    inp3 = jax.nn.log_softmax(logits3, axis=-1)
    target3 = jax.random.randint(k4, (B3, T3 + 1), 0, V3, dtype=jnp.int32)
    mask3 = (jnp.arange(T3 + 1)[None, :]
             < jnp.array([[T3], [T3 - 2]], dtype=jnp.int32)).astype(jnp.float32)
    out3 = language_model_criterion(inp3, target3, mask3, block_rows=8, force_gather=True)
    out3 = jax.block_until_ready(out3)
    ref3 = _reference(inp3, target3, mask3)
    assert jnp.allclose(out3, ref3, rtol=1e-5, atol=1e-5), ("gather", out3, ref3)

    # ---- Test 4: gather path with vocab NOT a multiple of 128 (window clamp) ----------
    V4 = 1000
    logits4 = jax.random.normal(k3, (B3, T3, V4), dtype=jnp.float32)
    inp4 = jax.nn.log_softmax(logits4, axis=-1)
    target4 = jax.random.randint(k4, (B3, T3 + 1), 0, V4, dtype=jnp.int32)
    out4 = language_model_criterion(inp4, target4, mask3, block_rows=8, force_gather=True)
    out4 = jax.block_until_ready(out4)
    ref4 = _reference(inp4, target4, mask3)
    assert jnp.allclose(out4, ref4, rtol=1e-5, atol=1e-5), ("gather V%128!=0", out4, ref4)

    print("KERNEL_OK")
</pallas_src>

<mosaic_0001>
module attributes {stable_mosaic.version = 11 : i64} {
  func.func @_lmc_stream_kernel(%arg0: i32, %arg1: memref<8x256xf32, #tpu.memory_space<vmem>>, %arg2: memref<8x1xi32, #tpu.memory_space<vmem>>, %arg3: memref<8x1xf32, #tpu.memory_space<vmem>>, %arg4: memref<1x8x128xf32, #tpu.memory_space<vmem>>) attributes {dimension_semantics = [#tpu.dimension_semantics<parallel>], iteration_bounds = array<i64: 3>, scalar_prefetch = 0 : i64, scratch_operands = 0 : i64, tpu.core_type = #tpu.core_type<tc>, window_params = [{transform_indices = @transform_0, window_bounds = array<i64: 8, 256>}, {transform_indices = @transform_1, window_bounds = array<i64: 8, 1>}, {transform_indices = @transform_2, window_bounds = array<i64: 8, 1>}, {transform_indices = @transform_3, window_bounds = array<i64: 1, 8, 128>}]} {
    %c0 = arith.constant 0 : index
    %c0_0 = arith.constant 0 : index
    %0 = vector.load %arg1[%c0, %c0_0] : memref<8x256xf32, #tpu.memory_space<vmem>>, vector<8x256xf32>
    %c0_1 = arith.constant 0 : index
    %c0_2 = arith.constant 0 : index
    %1 = vector.load %arg2[%c0_1, %c0_2] : memref<8x1xi32, #tpu.memory_space<vmem>>, vector<8x1xi32>
    %c0_3 = arith.constant 0 : index
    %c0_4 = arith.constant 0 : index
    %2 = vector.load %arg3[%c0_3, %c0_4] : memref<8x1xf32, #tpu.memory_space<vmem>>, vector<8x1xf32>
    %3 = tpu.iota {dimensions = array<i32: 1>} : vector<8x256xi32>
    %4 = vector.broadcast %1 : vector<8x1xi32> to vector<8x256xi32>
    %5 = arith.cmpi eq, %3, %4 : vector<8x256xi32>
    %c0_i32 = arith.constant 0 : i32
    %6 = arith.sitofp %c0_i32 : i32 to f32
    %7 = vector.broadcast %6 : f32 to vector<8x256xf32>
    %8 = arith.select %5, %0, %7 : vector<8x256xi1>, vector<8x256xf32>
    %cst = arith.constant dense<0.000000e+00> : vector<8xf32>
    %9 = vector.multi_reduction <add>, %8, %cst [1] : vector<8x256xf32> to vector<8xf32>
    %10 = vector.shape_cast %9 : vector<8xf32> to vector<8x1xf32>
    %cst_5 = arith.constant 0.000000e+00 : f32
    %11 = vector.broadcast %cst_5 : f32 to vector<8x1xf32>
    %12 = arith.cmpf one, %2, %11 : vector<8x1xf32>
    %cst_6 = arith.constant 0.000000e+00 : f32
    %13 = vector.broadcast %cst_6 : f32 to vector<8x1xf32>
    %14 = arith.subf %13, %10 : vector<8x1xf32>
    %15 = arith.mulf %14, %2 : vector<8x1xf32>
    %cst_7 = arith.constant 0.000000e+00 : f32
    %16 = vector.broadcast %cst_7 : f32 to vector<8x1xf32>
    %17 = arith.select %12, %15, %16 : vector<8x1xi1>, vector<8x1xf32>
    %18 = vector.shape_cast %17 : vector<8x1xf32> to vector<1x8x1xf32>
    %cst_8 = arith.constant dense<0.000000e+00> : vector<1xf32>
    %19 = vector.multi_reduction <add>, %18, %cst_8 [1, 2] : vector<1x8x1xf32> to vector<1xf32>
    %20 = vector.shape_cast %19 : vector<1xf32> to vector<1x1x1xf32>
    %21 = vector.extract %20[0, 0, 0] : f32 from vector<1x1x1xf32>
    %22 = vector.broadcast %21 : f32 to vector<1x8x128xf32>
    %c0_9 = arith.constant 0 : index
    %c0_10 = arith.constant 0 : index
    %c0_11 = arith.constant 0 : index
    %23 = vector.load %arg4[%c0_9, %c0_10, %c0_11] : memref<1x8x128xf32, #tpu.memory_space<vmem>>, vector<1x8x128xf32>
    tpu.vector_store %arg4[%c0_9, %c0_10, %c0_11], %22 {strides = array<i32>} : memref<1x8x128xf32, #tpu.memory_space<vmem>>, vector<1x8x128xf32>,
    return
  }
  func.func @transform_0(%arg0: i32) -> (i32, i32) {
    %c0_i32 = arith.constant 0 : i32
    %c0_i32_0 = arith.constant 0 : i32
    return %arg0, %c0_i32 : i32, i32
  }
  func.func @transform_1(%arg0: i32) -> (i32, i32) {
    %c0_i32 = arith.constant 0 : i32
    %c0_i32_0 = arith.constant 0 : i32
    return %arg0, %c0_i32 : i32, i32
  }
  func.func @transform_2(%arg0: i32) -> (i32, i32) {
    %c0_i32 = arith.constant 0 : i32
    %c0_i32_0 = arith.constant 0 : i32
    return %arg0, %c0_i32 : i32, i32
  }
  func.func @transform_3(%arg0: i32) -> (i32, i32, i32) {
    %c0_i32 = arith.constant 0 : i32
    %c0_i32_0 = arith.constant 0 : i32
    %c0_i32_1 = arith.constant 0 : i32
    return %arg0, %c0_i32, %c0_i32_0 : i32, i32, i32
  }
}

</mosaic_0001>

<llo_original>
// kernel: tpu_custom_call.1
$region0: #{tpu_custom_call.1}
  #allocation0 [shape = 'u32[]', space=smem, size = 0x4, offset = 0x4, fixed_abs, tag = 'smem constant byte address 0x4 - core index']
  #allocation1 [shape = 'u32[72,128]{1,0:T(1,128)}', space=vmem, size = 0x9000, scoped, tag = 'internal scratch']
  %s0 = inlined_call_operand.vmem [shape: f32[18,256], index: 0, kind: input, shape index: {}]
  %s1 = inlined_call_operand.vmem [shape: s32[24,1], index: 1, kind: input, shape index: {}]
  %s2 = inlined_call_operand.vmem [shape: f32[24,1], index: 2, kind: input, shape index: {}]
  %s3 = inlined_call_operand.hbm [shape: f32[3,8,128], index: 3, kind: output, shape index: {}]
  %s4 = sld [smem:[#allocation0]]
  $region45: #{tpu_custom_call.1} parent=0
    _
  %s6 = ssub.s32 1, %s4
  %s7 = scalar_select 0, %s6, %s4
  $region1: #{tpu_custom_call.1} parent=0
    #allocation2 [shape = 'u8[8192]{0}', space=vmem, size = 0x2000, scoped, tag = 'output window, operand 0']
    #allocation3 [shape = 's32[2]{0}', space=sflag, size = 0x8, scoped, tag = 'scoped memory for tpu_custom_call.1']
    %8 = vsyncpa [#allocation3], 0
    %s9 = scalar_lea.sflag [#allocation3], 1
    %10 = vsyncpa %s9, 0
    loop: start=0, step=1, limit=5
    $region2: #{tpu_custom_call.1} parent=1 // loop_pre_header
      _
    $region3: #{tpu_custom_call.1} parent=1 // loop_header
      %s12 = sphi 0, %s16
      %p13 = scmp.ge.s32.totalorder %s12, 5
      %s22 = sphi 0, %s24
      %s25 = sphi 0, %s22
      %s26 = sphi 0, %s25
      %s42 = sphi 0, %s26
      %s48 = sphi 0, %s50
      %s51 = sphi 0, %s48
      %s52 = sphi 0, %s51
      %s68 = sphi 0, %s52
      %s74 = sphi 0, %s76
      %s77 = sphi 0, %s74
      %s78 = sphi 0, %s77
      %s94 = sphi 0, %s78
      %s100 = sphi 0, %s102
      %s103 = sphi 0, %s100
      %s104 = sphi 0, %s103
      %s120 = sphi 0, %s104
    $region4: #{tpu_custom_call.1} parent=1 // loop_header_branch
      %15 = sbr.rel (%p13) target = $region8
    $region5: #{tpu_custom_call.1} parent=1 // loop_body
      %s17 = ssub.s32 %s12, 1
      %s18 = ssub.s32 %s12, 2
      %s19 = sadd.s32 %s12, 1
      %s20 = ssub.s32 %s12, %s19
      %p21 = scmp.eq.s32.totalorder %s20, 0
      %s23 = sadd.s32 %s22, 1
      %s24 = scalar_select %p21, %s22, %s23
      %p27 = pneg %p21
      %p28 = scmp.eq.s32.totalorder %s12, 2
      %p29 = por %p27, %p28
      %p30 = scmp.ne.s32.totalorder %s22, %s25
      %p31 = scmp.eq.s32.totalorder %s12, 0
      %p32 = por %p30, %p31
      %p33 = scmp.ne.s32.totalorder %s22, %s25
      %p34 = scmp.eq.s32.totalorder %s17, 2
      %p35 = por %p33, %p34
      %p36 = scmp.ne.s32.totalorder %s25, %s26
      %p37 = scmp.eq.s32.totalorder %s17, 0
      %p38 = por %p36, %p37
      %p39 = scmp.ne.s32.totalorder %s25, %s26
      %p40 = scmp.eq.s32.totalorder %s18, 2
      %p41 = por %p39, %p40
      %p43 = scmp.ne.s32.totalorder %s26, %s42
      %p44 = scmp.eq.s32.totalorder %s18, 0
      %p45 = por %p43, %p44
      %s46 = ssub.s32 %s12, %s19
      %p47 = scmp.eq.s32.totalorder %s46, 0
      %s49 = sadd.s32 %s48, 1
      %s50 = scalar_select %p47, %s48, %s49
      %p53 = pneg %p47
      %p54 = scmp.eq.s32.totalorder %s12, 2
      %p55 = por %p53, %p54
      %p56 = scmp.ne.s32.totalorder %s48, %s51
      %p57 = scmp.eq.s32.totalorder %s12, 0
      %p58 = por %p56, %p57
      %p59 = scmp.ne.s32.totalorder %s48, %s51
      %p60 = scmp.eq.s32.totalorder %s17, 2
      %p61 = por %p59, %p60
      %p62 = scmp.ne.s32.totalorder %s51, %s52
      %p63 = scmp.eq.s32.totalorder %s17, 0
      %p64 = por %p62, %p63
      %p65 = scmp.ne.s32.totalorder %s51, %s52
      %p66 = scmp.eq.s32.totalorder %s18, 2
      %p67 = por %p65, %p66
      %p69 = scmp.ne.s32.totalorder %s52, %s68
      %p70 = scmp.eq.s32.totalorder %s18, 0
      %p71 = por %p69, %p70
      %s72 = ssub.s32 %s12, %s19
      %p73 = scmp.eq.s32.totalorder %s72, 0
      %s75 = sadd.s32 %s74, 1
      %s76 = scalar_select %p73, %s74, %s75
      %p79 = pneg %p73
      %p80 = scmp.eq.s32.totalorder %s12, 2
      %p81 = por %p79, %p80
      %p82 = scmp.ne.s32.totalorder %s74, %s77
      %p83 = scmp.eq.s32.totalorder %s12, 0
      %p84 = por %p82, %p83
      %p85 = scmp.ne.s32.totalorder %s74, %s77
      %p86 = scmp.eq.s32.totalorder %s17, 2
      %p87 = por %p85, %p86
      %p88 = scmp.ne.s32.totalorder %s77, %s78
      %p89 = scmp.eq.s32.totalorder %s17, 0
      %p90 = por %p88, %p89
      %p91 = scmp.ne.s32.totalorder %s77, %s78
      %p92 = scmp.eq.s32.totalorder %s18, 2
      %p93 = por %p91, %p92
      %p95 = scmp.ne.s32.totalorder %s78, %s94
      %p96 = scmp.eq.s32.totalorder %s18, 0
      %p97 = por %p95, %p96
      %s98 = ssub.s32 %s12, %s19
      %p99 = scmp.eq.s32.totalorder %s98, 0
      %s101 = sadd.s32 %s100, 1
      %s102 = scalar_select %p99, %s100, %s101
      %p105 = pneg %p99
      %p106 = scmp.eq.s32.totalorder %s12, 2
      %p107 = por %p105, %p106
      %p108 = scmp.ne.s32.totalorder %s100, %s103
      %p109 = scmp.eq.s32.totalorder %s12, 0
      %p110 = por %p108, %p109
      %p111 = scmp.ne.s32.totalorder %s100, %s103
      %p112 = scmp.eq.s32.totalorder %s17, 2
      %p113 = por %p111, %p112
      %p114 = scmp.ne.s32.totalorder %s103, %s104
      %p115 = scmp.eq.s32.totalorder %s17, 0
      %p116 = por %p114, %p115
      %p117 = scmp.ne.s32.totalorder %s103, %s104
      %p118 = scmp.eq.s32.totalorder %s18, 2
      %p119 = por %p117, %p118
      %p121 = scmp.ne.s32.totalorder %s104, %s120
      %p122 = scmp.eq.s32.totalorder %s18, 0
      %p123 = por %p121, %p122
      %p124 = scmp.le.s32.totalorder 1, %s12
      %p125 = scmp.lt.s32.totalorder %s12, 4
      %p126 = pnand %p124, %p125
      %p127 = pneg %p126
      // Predicated region
      $region9: #{tpu_custom_call.1} parent=5 // pred_check
        _
      $region10: #{tpu_custom_call.1} parent=5 // pred_check_branch
        %129 = sbr.rel (%p126) target = $region12
      $region11: #{tpu_custom_call.1} parent=5 // pred_region
        %s130 = ssub.s32 %s12, 1
      $region12: #{tpu_custom_call.1} parent=5 // pred_fallthru
        _
      %p131 = scmp.lt.s32.totalorder %s12, 3
      // Predicated region
      $region13: #{tpu_custom_call.1} parent=5 // pred_check
        %p132 = pneg %p131
      $region14: #{tpu_custom_call.1} parent=5 // pred_check_branch
        %134 = sbr.rel (%p132) target = $region16
      $region15: #{tpu_custom_call.1} parent=5 // pred_region
        // Predicated region
        $region17: #{tpu_custom_call.1} parent=15 // pred_check
          %p135 = pneg %p32
        $region18: #{tpu_custom_call.1} parent=15 // pred_check_branch
          %137 = sbr.rel (%p135) target = $region20
        $region19: #{tpu_custom_call.1} parent=15 // pred_region
          %p138 = scmp.lt.s32.totalorder %s12, 2
          %s139 = scalar_select %p138, %s12, 2
          %s140 = smul.addr %s139, 2
          %s141 = smul.addr %s140, 8
          %s142 = scalar_lea.vmem %s0, %s141
        $region20: #{tpu_custom_call.1} parent=15 // pred_fallthru
          _
        // Predicated region
        $region21: #{tpu_custom_call.1} parent=15 // pred_check
          %p143 = pneg %p58
        $region22: #{tpu_custom_call.1} parent=15 // pred_check_branch
          %145 = sbr.rel (%p143) target = $region24
        $region23: #{tpu_custom_call.1} parent=15 // pred_region
          %p146 = scmp.lt.s32.totalorder %s12, 2
          %s147 = scalar_select %p146, %s12, 2
          %s148 = smul.addr %s147, 8
          %s149 = scalar_lea.vmem %s1, %s148
        $region24: #{tpu_custom_call.1} parent=15 // pred_fallthru
          _
        // Predicated region
        $region25: #{tpu_custom_call.1} parent=15 // pred_check
          %p150 = pneg %p84
        $region26: #{tpu_custom_call.1} parent=15 // pred_check_branch
          %152 = sbr.rel (%p150) target = $region28
        $region27: #{tpu_custom_call.1} parent=15 // pred_region
          %p153 = scmp.lt.s32.totalorder %s12, 2
          %s154 = scalar_select %p153, %s12, 2
          %s155 = smul.addr %s154, 8
          %s156 = scalar_lea.vmem %s2, %s155
        $region28: #{tpu_custom_call.1} parent=15 // pred_fallthru
          _
      $region16: #{tpu_custom_call.1} parent=5 // pred_fallthru
        _
      %p157 = scmp.le.s32.totalorder 1, %s12
      %p158 = scmp.lt.s32.totalorder %s12, 4
      %p159 = pnand %p157, %p158
      %p160 = pneg %p159
      // Predicated region
      $region29: #{tpu_custom_call.1} parent=5 // pred_check
        _
      $region30: #{tpu_custom_call.1} parent=5 // pred_check_branch
        %162 = sbr.rel (%p159) target = $region32
      $region31: #{tpu_custom_call.1} parent=5 // pred_region
        %s163 = ssub.s32 %s12, 1
        %p164 = scmp.lt.s32.totalorder %s17, 2
        %s165 = scalar_select %p164, %s17, 2
        %s166 = smul.addr %s165, 2
        %s167 = smul.addr %s166, 8
        %s168 = scalar_lea.vmem %s0, %s167
        %p169 = pneg %p38
        %p170 = pneg %p35
        %p171 = scmp.lt.s32.totalorder %s17, 2
        %s172 = scalar_select %p171, %s17, 2
        %s173 = smul.addr %s172, 8
        %s174 = scalar_lea.vmem %s1, %s173
        %p175 = pneg %p64
        %p176 = pneg %p61
        %p177 = scmp.lt.s32.totalorder %s17, 2
        %s178 = scalar_select %p177, %s17, 2
        %s179 = smul.addr %s178, 8
        %s180 = scalar_lea.vmem %s2, %s179
        %p181 = pneg %p90
        %p182 = pneg %p87
        %p183 = pneg %p116
        %p184 = pneg %p113
        %s185 = sand.u32 %s103, 1
        %s186 = scalar_lea.sflag [#allocation3], %s185
        %s187 = sand.u32 %s103, 1
        %s188 = smul.addr %s187, 8
        %s189 = scalar_lea.vmem [#allocation2], %s188
        %p190 = scmp.lt.s32.totalorder %s17, 2
        %s191 = scalar_select %p190, %s17, 2
        %s192 = smul.addr %s191, 2
        %s193 = smul.addr %s192, 8
        %s194 = scalar_lea.vmem %s0, %s193
        %p195 = scmp.lt.s32.totalorder %s17, 2
        %s196 = scalar_select %p195, %s17, 2
        %s197 = smul.addr %s196, 8
        %s198 = scalar_lea.vmem %s1, %s197
        %p199 = scmp.lt.s32.totalorder %s17, 2
        %s200 = scalar_select %p199, %s17, 2
        %s201 = smul.addr %s200, 8
        %s202 = scalar_lea.vmem %s2, %s201
        %v203 = vld [vmem:[%s194] sm:$0xff]
        %v204 = vld [vmem:[%s194 + $0x8] sm:$0xff]
        %v205 = vld [vmem:[%s198] sm:$0xff]
        %v206 = vld [vmem:[%s202] sm:$0xff]
        %v207 = vlaneseq
        %v208 = vand.u32 %v207, 127
        %v209 = vadd.s32 %v208, 128
        %210 = vset.pattern.permute.xlu0 0
        %211 = vperm.xlu0 %210, %v205
        %v212 = vpop.permute.xlu0 %211
        %vm213 = vcmp.eq.s32.totalorder %v208, %v212
        %vm214 = vcmp.eq.s32.totalorder %v209, %v212
        %v215 = vsel %vm213, %v203, 0.0
        %v216 = vsel %vm214, %v204, 0.0
        %v217 = vadd.f32 %v215, %v216
        %218 = vadd.xlane.f32.xlu0 %v217
        %v219 = vpop.xlane.xlu0 %218
        %vm220 = vcmp.ne.f32.partialorder %v206, 0.0
        %v221 = vsub.f32 0.0, %v219
        %v222 = vmul.f32 %v221, %v206
        %v223 = vsel %vm220, %v222, 0.0
        %vm224 = vcmask 7168
        %v225 = vsel %vm224, %v223, 0.0
        %226 = vadd.xlane.f32.xlu0 %v225
        %v227 = vpop.xlane.xlu0 %226
        %v228 = vrot.slane %v227, 4
        %v229 = vadd.f32 %v227, %v228
        %v230 = vrot.slane %v229, 2
        %v231 = vadd.f32 %v229, %v230
        %v232 = vrot.slane %v231, 1
        %v233 = vadd.f32 %v231, %v232
        %s234 = vtos %v233
        %v235 = vstv %s234
        %236 = vst [vmem:[%s189] sm:$0xff] %v235
        %s237 = sand.u32 %s103, 1
        %s238 = scalar_lea.sflag [#allocation3], %s237
        %s239 = sand.u32 %s103, 1
        %s240 = smul.addr %s239, 8
        %s241 = scalar_lea.vmem [#allocation2], %s240
        // Predicated region
        $region33: #{tpu_custom_call.1} parent=31 // pred_check
          %p242 = pneg %p113
        $region34: #{tpu_custom_call.1} parent=31 // pred_check_branch
          %244 = sbr.rel (%p242) target = $region36
        $region35: #{tpu_custom_call.1} parent=31 // pred_region
          %246 = vsyncadd %s238, 0
          %s247 = smul.addr %s17, 8
          %s248 = scalar_lea.hbm %s3, %s247
          %s250 = sshll.u32 %s241, 4
          %s251 = int_to_ptr.vmem [resolvable:$true] %s250
          %s252 = sshll.u32 %s248, 4
          %s253 = int_to_ptr.hbm [resolvable:$true] %s252
          %255 = dma.vmem_to_hbm [thread:$0]  %s251, 128, %s253, %s238
        $region36: #{tpu_custom_call.1} parent=31 // pred_fallthru
          _
      $region32: #{tpu_custom_call.1} parent=5 // pred_fallthru
        _
      %p256 = scmp.le.s32.totalorder 2, %s12
      // Predicated region
      $region37: #{tpu_custom_call.1} parent=5 // pred_check
        %p257 = pneg %p256
      $region38: #{tpu_custom_call.1} parent=5 // pred_check_branch
        %259 = sbr.rel (%p257) target = $region40
      $region39: #{tpu_custom_call.1} parent=5 // pred_region
        %s260 = ssub.s32 %s12, 2
        // Predicated region
        $region41: #{tpu_custom_call.1} parent=39 // pred_check
          %p261 = pneg %p119
        $region42: #{tpu_custom_call.1} parent=39 // pred_check_branch
          %263 = sbr.rel (%p261) target = $region44
        $region43: #{tpu_custom_call.1} parent=39 // pred_region
          %s264 = sand.u32 %s104, 1
          %s265 = scalar_lea.sflag [#allocation3], %s264
          %s266 = sand.u32 %s104, 1
          %s267 = smul.addr %s266, 8
          %s268 = scalar_lea.vmem [#allocation2], %s267
          %270 = dma.done %s265, 128
        $region44: #{tpu_custom_call.1} parent=39 // pred_fallthru
          _
      $region40: #{tpu_custom_call.1} parent=5 // pred_fallthru
        _
    $region6: #{tpu_custom_call.1} parent=1 // loop_footer
      %s16 = sadd.s32 1, %s12
    $region7: #{tpu_custom_call.1} parent=1 // loop_footer_branch
      %11 = sbr.rel target = $region3
    $region8: #{tpu_custom_call.1} parent=1 // loop_exit
      _
    %271 = vsyncpa [#allocation3], 1
    %s272 = scalar_lea.sflag [#allocation3], 1
    %273 = vsyncpa %s272, 1

</llo_original>
